<compile_context>
chip_gen: v7x
topology: tpu7x:2x2x1
jax: 0.10.0
libtpu: 0.0.40
codegen_flags: <defaults>
</compile_context>

<pallas_src>
import functools

import jax
import jax.numpy as jnp
from jax import lax
from jax.experimental import pallas as pl
from jax.experimental.pallas import tpu as pltpu

LANE = 128
SUB = 8

# contract last dim of lhs with last dim of rhs (y = a @ b.T without transposes)
_DN_LAST = (((1,), (1,)), ((), ()))


def _round_up(x, m):
    return ((x + m - 1) // m) * m


def _maybe_pad2d(x, rows, cols):
    """Zero-pad a 2D array only if it is not already (rows, cols)."""
    r, c = x.shape
    if r == rows and c == cols:
        return x
    return jnp.pad(x, ((0, rows - r), (0, cols - c)))


def _vmem_limit(resident_bytes):
    """2x headroom over the estimated footprint, clamped to [32, 64] MiB so it
    is valid on every TPU generation (v7x has 64 MiB physical per TC)."""
    return int(max(32 * 1024 * 1024, min(64 * 1024 * 1024, 2 * resident_bytes)))


# --------------------------------------------------------------------------
# Kernel A (runs once): transformed class means + their squared norms.
# --------------------------------------------------------------------------
def means_kernel(mean_ref, w_ref, tm_ref, m2_ref):
    tm = lax.dot_general(mean_ref[...], w_ref[...], dimension_numbers=_DN_LAST,
                         preferred_element_type=jnp.float32)          # (C_p, Dout_p)
    tm_ref[...] = tm
    # ||tm||^2 directly in (1, C_p) lane layout via a ones-row matmul (no transpose).
    ones_row = jnp.ones((1, tm.shape[-1]), jnp.float32)
    m2_ref[...] = lax.dot_general(ones_row, tm * tm, dimension_numbers=_DN_LAST,
                                  preferred_element_type=jnp.float32)  # (1, C_p)


# --------------------------------------------------------------------------
# Kernel B (per N tile): feature transform, distances, per-tile CE partial sum.
# --------------------------------------------------------------------------
def ncmml_tile_kernel(feat_ref, w_ref, tm_ref, m2_ref, tgt_ref,
                      tf_ref, nd_ref, loss_ref, *, num_classes, tile_n, total_n):
    # --- feature transform: features_tile @ W.T (single MXU matmul) ----------
    tf = lax.dot_general(feat_ref[...], w_ref[...], dimension_numbers=_DN_LAST,
                         preferred_element_type=jnp.float32)          # (tn, Dout_p)
    tf_ref[...] = tf

    # --- negative pairwise euclidean distance (Gram-matrix form) -------------
    tm = tm_ref[...]                                                  # (C_p, Dout_p)
    cross = lax.dot_general(tf, tm, dimension_numbers=_DN_LAST,
                            preferred_element_type=jnp.float32)       # (tn, C_p)
    f2 = jnp.sum(tf * tf, axis=-1, keepdims=True)                     # (tn, 1)
    # Note: clamp hides catastrophic cancellation when a feature ~= a mean;
    # fine for the forward pass (gradients would need an eps-stabilized sqrt).
    d2 = jnp.maximum(f2 + m2_ref[...] - 2.0 * cross, 0.0)
    neg_dists = -jnp.sqrt(d2)                                         # (tn, C_p)
    nd_ref[...] = neg_dists

    # --- per-sample cross-entropy (padded classes masked out) ----------------
    n, c = neg_dists.shape
    class_ids = lax.broadcasted_iota(jnp.int32, (n, c), 1)
    logits = jnp.where(class_ids < num_classes, neg_dists, -1e30)
    mx = jnp.max(logits, axis=-1, keepdims=True)
    lse = jnp.log(jnp.sum(jnp.exp(logits - mx), axis=-1, keepdims=True)) + mx
    tgt = tgt_ref[...]                                                # (tn, 1) int32
    onehot = (class_ids == tgt).astype(jnp.float32)
    tgt_logit = jnp.sum(onehot * neg_dists, axis=-1, keepdims=True)   # (tn, 1)
    per_sample = lse - tgt_logit                                      # (tn, 1)

    # Mask rows past the true batch size, reduce to a per-tile partial sum and
    # store it as a single lane-dense (1, 8, 128) block (constant 4 KiB/step).
    row_ids = lax.broadcasted_iota(jnp.int32, (n, 1), 0) + pl.program_id(0) * tile_n
    per_sample = jnp.where(row_ids < total_n, per_sample, 0.0)
    loss_ref[...] = jnp.full(loss_ref.shape, jnp.sum(per_sample), jnp.float32)


# --------------------------------------------------------------------------
# Wrapper
# --------------------------------------------------------------------------
def ncmml_forward(features, mean_features, weight, targets, *, tile_n=256):
    """features: (N, Din) f32, mean_features: (C, Din) f32,
    weight: (Dout, Din) f32 (PyTorch nn.Linear layout, y = x @ W.T), targets: (N,).
    Returns (transformed_features, transformed_means, negative_dists, loss)."""
    N, Din = features.shape
    C, _ = mean_features.shape
    Dout = weight.shape[0]
    f32 = jnp.float32

    Din_p = _round_up(Din, LANE)
    Dout_p = _round_up(Dout, LANE)
    C_p = _round_up(C, LANE)
    tn = min(tile_n, _round_up(N, SUB))
    N_p = _round_up(N, tn)
    n_tiles = N_p // tn

    # Only materialize padded copies when needed.
    feat_p = _maybe_pad2d(features.astype(f32), N_p, Din_p)
    mean_p = _maybe_pad2d(mean_features.astype(f32), C_p, Din_p)
    w_p = _maybe_pad2d(weight.astype(f32), Dout_p, Din_p)
    tgt_p = _maybe_pad2d(targets.astype(jnp.int32).reshape(N, 1), N_p, 1)

    # ---------------- kernel A: transformed class means (once) ---------------
    means_bytes = 4 * (C_p * Din_p + Dout_p * Din_p + C_p * Dout_p + C_p)
    tm_p, m2_p = pl.pallas_call(
        means_kernel,
        out_shape=(
            jax.ShapeDtypeStruct((C_p, Dout_p), f32),
            jax.ShapeDtypeStruct((1, C_p), f32),
        ),
        grid=(1,),
        in_specs=[
            pl.BlockSpec((C_p, Din_p), lambda i: (0, 0)),
            pl.BlockSpec((Dout_p, Din_p), lambda i: (0, 0)),
        ],
        out_specs=(
            pl.BlockSpec((C_p, Dout_p), lambda i: (0, 0)),
            pl.BlockSpec((1, C_p), lambda i: (0, 0)),
        ),
        compiler_params=pltpu.CompilerParams(
            dimension_semantics=("arbitrary",),
            vmem_limit_bytes=_vmem_limit(means_bytes),
        ),
    )(mean_p, w_p)

    # ---------------- kernel B: per-N-tile forward + CE ----------------------
    kernel = functools.partial(ncmml_tile_kernel, num_classes=C, tile_n=tn, total_n=N)
    main_bytes = 4 * (
        2 * tn * (Din_p + Dout_p + C_p + 1)            # tiled inputs/outputs (double-buffered)
        + (Dout_p * Din_p + C_p * Dout_p + C_p)        # resident weight / tm / m2
        + 2 * SUB * LANE                               # loss partials
    )
    vmem_limit = _vmem_limit(main_bytes)

    def run(single_buffer_resident):
        def resident(shape):
            # Grid-invariant operands: single-buffer them so the fixed VMEM
            # footprint is halved (matters on v7x's 64 MiB VMEM).
            if single_buffer_resident:
                return pl.BlockSpec(shape, lambda i: (0, 0),
                                    pipeline_mode=pl.Buffered(1))
            return pl.BlockSpec(shape, lambda i: (0, 0))

        return pl.pallas_call(
            kernel,
            out_shape=(
                jax.ShapeDtypeStruct((N_p, Dout_p), f32),        # transformed features
                jax.ShapeDtypeStruct((N_p, C_p), f32),           # negative dists
                jax.ShapeDtypeStruct((n_tiles, SUB, LANE), f32),  # per-tile CE sums
            ),
            grid=(n_tiles,),
            in_specs=[
                pl.BlockSpec((tn, Din_p), lambda i: (i, 0)),     # features tile
                resident((Dout_p, Din_p)),                       # weight (resident)
                resident((C_p, Dout_p)),                         # transformed means
                resident((1, C_p)),                              # ||tm||^2 row
                pl.BlockSpec((tn, 1), lambda i: (i, 0)),         # targets tile
            ],
            out_specs=(
                pl.BlockSpec((tn, Dout_p), lambda i: (i, 0)),
                pl.BlockSpec((tn, C_p), lambda i: (i, 0)),
                pl.BlockSpec((1, SUB, LANE), lambda i: (i, 0, 0)),
            ),
            compiler_params=pltpu.CompilerParams(
                # No revisited output blocks any more -> N-tile axis can be
                # "parallel" (v7x megacore shards tiles across both TCs).
                dimension_semantics=("parallel",),
                vmem_limit_bytes=vmem_limit,
            ),
        )(feat_p, w_p, tm_p, m2_p, tgt_p)

    try:
        tf_p, nd_p, loss_parts = run(True)
    except Exception:
        # Fallback in case this JAX build rejects pipeline_mode=pl.Buffered(1).
        tf_p, nd_p, loss_parts = run(False)

    loss = jnp.sum(loss_parts[:, 0, 0]) / N
    return tf_p[:N, :Dout], tm_p[:C, :Dout], nd_p[:N, :C], loss


if __name__ == "__main__":
    # Small shapes consistent with the module:
    #   N=8 samples, in_features=32, out_features=16, C=4 classes.
    N, Din, Dout, C = 8, 32, 16, 4

    key = jax.random.PRNGKey(0)
    k_feat, k_mean, k_w, k_tgt = jax.random.split(key, 4)

    features = jax.random.normal(k_feat, (N, Din), dtype=jnp.float32)
    mean_features = jax.random.normal(k_mean, (C, Din), dtype=jnp.float32)
    # Deterministic "random" init for nn.Linear(Din -> Dout, bias=False)
    bound = 1.0 / jnp.sqrt(Din)
    weight = jax.random.uniform(k_w, (Dout, Din), dtype=jnp.float32,
                                minval=-bound, maxval=bound)
    targets = jax.random.randint(k_tgt, (N,), 0, C, dtype=jnp.int32)

    tf, tm, nd, loss = ncmml_forward(features, mean_features, weight, targets)
    jax.block_until_ready((tf, tm, nd, loss))

    # Pure-JAX reference check
    tf_ref = features @ weight.T
    tm_ref = mean_features @ weight.T
    d_ref = jnp.sqrt(jnp.maximum(
        jnp.sum((tf_ref[:, None, :] - tm_ref[None, :, :]) ** 2, axis=-1), 0.0))
    nd_ref = -d_ref
    logz = jax.scipy.special.logsumexp(nd_ref, axis=-1)
    loss_ref = jnp.mean(logz - nd_ref[jnp.arange(N), targets])

    assert tf.shape == (N, Dout) and tm.shape == (C, Dout) and nd.shape == (N, C)
    assert jnp.allclose(tf, tf_ref, atol=1e-5), "transform(features) mismatch"
    assert jnp.allclose(tm, tm_ref, atol=1e-5), "transform(means) mismatch"
    assert jnp.allclose(nd, nd_ref, atol=1e-4), "negative_dists mismatch"
    assert jnp.allclose(loss, loss_ref, atol=1e-5), "loss mismatch"

    print("KERNEL_OK")
</pallas_src>

<mosaic_0001>
module attributes {stable_mosaic.version = 11 : i64} {
  func.func @means_kernel(%arg0: i32, %arg1: memref<128x128xf32, #tpu.memory_space<vmem>>, %arg2: memref<128x128xf32, #tpu.memory_space<vmem>>, %arg3: memref<128x128xf32, #tpu.memory_space<vmem>>, %arg4: memref<1x128xf32, #tpu.memory_space<vmem>>) attributes {dimension_semantics = [#tpu.dimension_semantics<arbitrary>], iteration_bounds = array<i64: 1>, scalar_prefetch = 0 : i64, scratch_operands = 0 : i64, tpu.core_type = #tpu.core_type<tc>, window_params = [{pipeline_mode = #tpu.pipeline_mode<synchronous>, transform_indices = @transform_0, window_bounds = array<i64: 128, 128>}, {pipeline_mode = #tpu.pipeline_mode<synchronous>, transform_indices = @transform_1, window_bounds = array<i64: 128, 128>}, {pipeline_mode = #tpu.pipeline_mode<synchronous>, transform_indices = @transform_2, window_bounds = array<i64: 128, 128>}, {pipeline_mode = #tpu.pipeline_mode<synchronous>, transform_indices = @transform_3, window_bounds = array<i64: 1, 128>}]} {
    %c0 = arith.constant 0 : index
    %c0_0 = arith.constant 0 : index
    %0 = vector.load %arg1[%c0, %c0_0] : memref<128x128xf32, #tpu.memory_space<vmem>>, vector<128x128xf32>
    %c0_1 = arith.constant 0 : index
    %c0_2 = arith.constant 0 : index
    %1 = vector.load %arg2[%c0_1, %c0_2] : memref<128x128xf32, #tpu.memory_space<vmem>>, vector<128x128xf32>
    %cst = arith.constant dense<0.000000e+00> : vector<128x128xf32>
    %2 = tpu.matmul %0, %1, %cst {dimension_numbers = #tpu.dot_dimension_numbers<[1], [1], [0], [0], [0, 0, 1, 0], [], []>} : vector<128x128xf32>, vector<128x128xf32>, vector<128x128xf32> -> vector<128x128xf32>
    %c0_3 = arith.constant 0 : index
    %c0_4 = arith.constant 0 : index
    %3 = vector.load %arg3[%c0_3, %c0_4] : memref<128x128xf32, #tpu.memory_space<vmem>>, vector<128x128xf32>
    tpu.vector_store %arg3[%c0_3, %c0_4], %2 {strides = array<i32>} : memref<128x128xf32, #tpu.memory_space<vmem>>, vector<128x128xf32>,
    %cst_5 = arith.constant 1.000000e+00 : f32
    %4 = vector.broadcast %cst_5 : f32 to vector<1x128xf32>
    %5 = arith.mulf %2, %2 : vector<128x128xf32>
    %cst_6 = arith.constant dense<0.000000e+00> : vector<1x128xf32>
    %6 = tpu.matmul %4, %5, %cst_6 {dimension_numbers = #tpu.dot_dimension_numbers<[1], [1], [0], [0], [0, 0, 1, 0], [], []>} : vector<1x128xf32>, vector<128x128xf32>, vector<1x128xf32> -> vector<1x128xf32>
    %c0_7 = arith.constant 0 : index
    %c0_8 = arith.constant 0 : index
    %7 = vector.load %arg4[%c0_7, %c0_8] : memref<1x128xf32, #tpu.memory_space<vmem>>, vector<1x128xf32>
    tpu.vector_store %arg4[%c0_7, %c0_8], %6 {strides = array<i32>} : memref<1x128xf32, #tpu.memory_space<vmem>>, vector<1x128xf32>,
    return
  }
  func.func @transform_0(%arg0: i32) -> (i32, i32) {
    %c0_i32 = arith.constant 0 : i32
    %c0_i32_0 = arith.constant 0 : i32
    %c0_i32_1 = arith.constant 0 : i32
    return %c0_i32, %c0_i32_0 : i32, i32
  }
  func.func @transform_1(%arg0: i32) -> (i32, i32) {
    %c0_i32 = arith.constant 0 : i32
    %c0_i32_0 = arith.constant 0 : i32
    %c0_i32_1 = arith.constant 0 : i32
    return %c0_i32, %c0_i32_0 : i32, i32
  }
  func.func @transform_2(%arg0: i32) -> (i32, i32) {
    %c0_i32 = arith.constant 0 : i32
    %c0_i32_0 = arith.constant 0 : i32
    %c0_i32_1 = arith.constant 0 : i32
    return %c0_i32, %c0_i32_0 : i32, i32
  }
  func.func @transform_3(%arg0: i32) -> (i32, i32) {
    %c0_i32 = arith.constant 0 : i32
    %c0_i32_0 = arith.constant 0 : i32
    %c0_i32_1 = arith.constant 0 : i32
    return %c0_i32, %c0_i32_0 : i32, i32
  }
}

</mosaic_0001>

<llo_original>
// kernel: tpu_custom_call.1
$region0: #{tpu_custom_call.1}
  #allocation0 [shape = 'u32[]', space=smem, size = 0x4, offset = 0x4, fixed_abs, tag = 'smem constant byte address 0x4 - core index']
  #allocation1 [shape = 'u32[144,128]{1,0:T(1,128)}', space=vmem, size = 0x12000, scoped, tag = 'internal scratch']
  %s0 = inlined_call_operand.hbm [shape: f32[128,128], index: 0, kind: input, shape index: {}]
  %s1 = inlined_call_operand.hbm [shape: f32[128,128], index: 1, kind: input, shape index: {}]
  %s2 = inlined_call_operand.hbm [shape: f32[128,128], index: 2, kind: output, shape index: {0}]
  %s3 = inlined_call_operand.hbm [shape: f32[1,128], index: 3, kind: output, shape index: {1}]
  %4 = xla_tuple %s2, %s3
  %s5 = sld [smem:[#allocation0]]
  $region34: #{tpu_custom_call.1} parent=0
    _
  %s7 = ssub.s32 1, %s5
  %s8 = scalar_select 0, %s7, %s5
  $region1: #{tpu_custom_call.1} parent=0
    #allocation2 [shape = 'u8[65536]{0}', space=vmem, size = 0x10000, scoped, tag = 'input window, operand 0, single buffered']
    #allocation3 [shape = 's32[1]{0}', space=sflag, size = 0x4, scoped, tag = 'scoped memory for tpu_custom_call.1']
    #allocation4 [shape = 's32[1]{0}', space=sflag, size = 0x4, scoped, tag = 'scoped memory for tpu_custom_call.1']
    #allocation5 [shape = 'u8[65536]{0}', space=vmem, size = 0x10000, scoped, tag = 'input window, operand 1, single buffered']
    #allocation6 [shape = 's32[1]{0}', space=sflag, size = 0x4, scoped, tag = 'scoped memory for tpu_custom_call.1']
    #allocation7 [shape = 'u8[65536]{0}', space=vmem, size = 0x10000, scoped, tag = 'output window, operand 0, single buffered']
    #allocation8 [shape = 'u8[512]{0}', space=vmem, size = 0x400, scoped, tag = 'output window, operand 1, single buffered']
    #allocation9 [shape = 's32[1]{0}', space=sflag, size = 0x4, scoped, tag = 'scoped memory for tpu_custom_call.1']
    %9 = vsyncpa [#allocation3], 0
    %10 = vsyncpa [#allocation6], 0
    %11 = vsyncpa [#allocation4], 0
    %12 = vsyncpa [#allocation9], 0
    // Predicated region
    $region2: #{tpu_custom_call.1} parent=1 // pred_check
      _
    $region3: #{tpu_custom_call.1} parent=1 // pred_check_branch
      %14 = sbr.rel (0) target = $region5
    $region4: #{tpu_custom_call.1} parent=1 // pred_region
      %s16 = ssub.s32 2048, 2048
      %17 = vsyncadd [#allocation3], %s16
      %s18 = sshll.u32 [#allocation2], 4
      %s19 = int_to_ptr.vmem [resolvable:$true] %s18
      %24 = dma.hbm_to_vmem [thread:$0]  %s0, 2048, %s19, [#allocation3], 128, 128, 8
    $region5: #{tpu_custom_call.1} parent=1 // pred_fallthru
      _
    // Predicated region
    $region6: #{tpu_custom_call.1} parent=1 // pred_check
      _
    $region7: #{tpu_custom_call.1} parent=1 // pred_check_branch
      %26 = sbr.rel (0) target = $region9
    $region8: #{tpu_custom_call.1} parent=1 // pred_region
      %s28 = ssub.s32 2048, 2048
      %29 = vsyncadd [#allocation6], %s28
      %s30 = sshll.u32 [#allocation5], 4
      %s31 = int_to_ptr.vmem [resolvable:$true] %s30
      %36 = dma.hbm_to_vmem [thread:$0]  %s1, 2048, %s31, [#allocation6], 128, 128, 8
    $region9: #{tpu_custom_call.1} parent=1 // pred_fallthru
      _
    // Predicated region
    $region10: #{tpu_custom_call.1} parent=1 // pred_check
      _
    $region11: #{tpu_custom_call.1} parent=1 // pred_check_branch
      %38 = sbr.rel (0) target = $region13
    $region12: #{tpu_custom_call.1} parent=1 // pred_region
      %39 = dma.done [#allocation3], 2048
    $region13: #{tpu_custom_call.1} parent=1 // pred_fallthru
      _
    // Predicated region
    $region14: #{tpu_custom_call.1} parent=1 // pred_check
      _
    $region15: #{tpu_custom_call.1} parent=1 // pred_check_branch
      %41 = sbr.rel (0) target = $region17
    $region16: #{tpu_custom_call.1} parent=1 // pred_region
      %42 = dma.done [#allocation6], 2048
    $region17: #{tpu_custom_call.1} parent=1 // pred_fallthru
      _
    %v43 = vld [vmem:[#allocation2] sm:$0xff]
    %v44 = vld [vmem:[#allocation2 + $0x8] sm:$0xff]
    %v45 = vld [vmem:[#allocation2 + $0x10] sm:$0xff]
    %v46 = vld [vmem:[#allocation2 + $0x18] sm:$0xff]
    %v47 = vld [vmem:[#allocation2 + $0x20] sm:$0xff]
    %v48 = vld [vmem:[#allocation2 + $0x28] sm:$0xff]
    %v49 = vld [vmem:[#allocation2 + $0x30] sm:$0xff]
    %v50 = vld [vmem:[#allocation2 + $0x38] sm:$0xff]
    %v51 = vld [vmem:[#allocation2 + $0x40] sm:$0xff]
    %v52 = vld [vmem:[#allocation2 + $0x48] sm:$0xff]
    %v53 = vld [vmem:[#allocation2 + $0x50] sm:$0xff]
    %v54 = vld [vmem:[#allocation2 + $0x58] sm:$0xff]
    %v55 = vld [vmem:[#allocation2 + $0x60] sm:$0xff]
    %v56 = vld [vmem:[#allocation2 + $0x68] sm:$0xff]
    %v57 = vld [vmem:[#allocation2 + $0x70] sm:$0xff]
    %v58 = vld [vmem:[#allocation2 + $0x78] sm:$0xff]
    %v59 = vld [vmem:[#allocation5] sm:$0xff]
    %v60 = vld [vmem:[#allocation5 + $0x8] sm:$0xff]
    %v61 = vld [vmem:[#allocation5 + $0x10] sm:$0xff]
    %v62 = vld [vmem:[#allocation5 + $0x18] sm:$0xff]
    %v63 = vld [vmem:[#allocation5 + $0x20] sm:$0xff]
    %v64 = vld [vmem:[#allocation5 + $0x28] sm:$0xff]
    %v65 = vld [vmem:[#allocation5 + $0x30] sm:$0xff]
    %v66 = vld [vmem:[#allocation5 + $0x38] sm:$0xff]
    %v67 = vld [vmem:[#allocation5 + $0x40] sm:$0xff]
    %v68 = vld [vmem:[#allocation5 + $0x48] sm:$0xff]
    %v69 = vld [vmem:[#allocation5 + $0x50] sm:$0xff]
    %v70 = vld [vmem:[#allocation5 + $0x58] sm:$0xff]
    %v71 = vld [vmem:[#allocation5 + $0x60] sm:$0xff]
    %v72 = vld [vmem:[#allocation5 + $0x68] sm:$0xff]
    %v73 = vld [vmem:[#allocation5 + $0x70] sm:$0xff]
    %v74 = vld [vmem:[#allocation5 + $0x78] sm:$0xff]
    %75 = vmatprep.subr.mxu0 0.0
    %76 = vmatpush1.xpose.msra.mxu0 %v59
    %77 = vmatprep.subr.mxu0 0.0
    %78 = vmatpush1.xpose.msra.mxu0 %v60
    %79 = vmatprep.subr.mxu0 0.0
    %80 = vmatpush1.xpose.msra.mxu0 %v61
    %81 = vmatprep.subr.mxu0 0.0
    %82 = vmatpush1.xpose.msra.mxu0 %v62
    %83 = vmatprep.subr.mxu0 0.0
    %84 = vmatpush1.xpose.msra.mxu0 %v63
    %85 = vmatprep.subr.mxu0 0.0
    %86 = vmatpush1.xpose.msra.mxu0 %v64
    %87 = vmatprep.subr.mxu0 0.0
    %88 = vmatpush1.xpose.msra.mxu0 %v65
    %89 = vmatprep.subr.mxu0 0.0
    %90 = vmatpush1.xpose.msra.mxu0 %v66
    %91 = vmatprep.subr.mxu0 0.0
    %92 = vmatpush1.xpose.msra.mxu0 %v67
    %93 = vmatprep.subr.mxu0 0.0
    %94 = vmatpush1.xpose.msra.mxu0 %v68
    %95 = vmatprep.subr.mxu0 0.0
    %96 = vmatpush1.xpose.msra.mxu0 %v69
    %97 = vmatprep.subr.mxu0 0.0
    %98 = vmatpush1.xpose.msra.mxu0 %v70
    %99 = vmatprep.subr.mxu0 0.0
    %100 = vmatpush1.xpose.msra.mxu0 %v71
    %101 = vmatprep.subr.mxu0 0.0
    %102 = vmatpush1.xpose.msra.mxu0 %v72
    %103 = vmatprep.subr.mxu0 0.0
    %104 = vmatpush1.xpose.msra.mxu0 %v73
    %105 = vmatprep.subr.mxu0 0.0
    %106 = vmatpush1.xpose.msra.mxu0 %v74
    %107 = vmatprep.subr.mxu0 0.0
    %108 = vmatpush1.xpose.msra.mxu0 0.0
    %109 = vmatprep.subr.mxu0 0.0
    %110 = vmatpush1.xpose.msra.mxu0 0.0
    %111 = vmatprep.subr.mxu0 0.0
    %112 = vmatpush1.xpose.msra.mxu0 0.0
    %113 = vmatprep.subr.mxu0 0.0
    %114 = vmatpush1.xpose.msra.mxu0 0.0
    %115 = vmatprep.subr.mxu0 0.0
    %116 = vmatpush1.xpose.msra.mxu0 0.0
    %117 = vmatprep.subr.mxu0 0.0
    %118 = vmatpush1.xpose.msra.mxu0 0.0
    %119 = vmatprep.subr.mxu0 0.0
    %120 = vmatpush1.xpose.msra.mxu0 0.0
    %121 = vmatprep.subr.mxu0 0.0
    %122 = vmatpush1.xpose.msra.mxu0 0.0
    %123 = vmatprep.subr.mxu0 0.0
    %124 = vmatpush1.xpose.msra.mxu0 0.0
    %125 = vmatprep.subr.mxu0 0.0
    %126 = vmatpush1.xpose.msra.mxu0 0.0
    %127 = vmatprep.subr.mxu0 0.0
    %128 = vmatpush1.xpose.msra.mxu0 0.0
    %129 = vmatprep.subr.mxu0 0.0
    %130 = vmatpush1.xpose.msra.mxu0 0.0
    %131 = vmatprep.subr.mxu0 0.0
    %132 = vmatpush1.xpose.msra.mxu0 0.0
    %133 = vmatprep.subr.mxu0 0.0
    %134 = vmatpush1.xpose.msra.mxu0 0.0
    %135 = vmatprep.subr.mxu0 0.0
    %136 = vmatpush1.xpose.msra.mxu0 0.0
    %137 = vmatprep.subr.mxu0 0.0
    %138 = vmatpush1.xpose.msra.mxu0 0.0
    %139 = vmatprep.mubr.f32.mxu0 0.0
    %140 = vmatmul.mubr.f32.gmra.mrb[0].mxu0 %v43
    %v141 = vpop.f32.mrb[0].mxu0
    %v142 = vadd.f32 0.0, %v141
    %v143 = vpop.f32.mrb[0].mxu0
    %144 = vmatprep.mubr.f32.mxu0 0.0
    %145 = vmatmul.mubr.f32.gmra.mrb[0].mxu0 %v44
    %v146 = vpop.f32.mrb[0].mxu0
    %v147 = vadd.f32 0.0, %v146
    %v148 = vpop.f32.mrb[0].mxu0
    %149 = vmatprep.mubr.f32.mxu0 0.0
    %150 = vmatmul.mubr.f32.gmra.mrb[0].mxu0 %v45
    %v151 = vpop.f32.mrb[0].mxu0
    %v152 = vadd.f32 0.0, %v151
    %v153 = vpop.f32.mrb[0].mxu0
    %154 = vmatprep.mubr.f32.mxu0 0.0
    %155 = vmatmul.mubr.f32.gmra.mrb[0].mxu0 %v46
    %v156 = vpop.f32.mrb[0].mxu0
    %v157 = vadd.f32 0.0, %v156
    %v158 = vpop.f32.mrb[0].mxu0
    %159 = vmatprep.mubr.f32.mxu0 0.0
    %160 = vmatmul.mubr.f32.gmra.mrb[0].mxu0 %v47
    %v161 = vpop.f32.mrb[0].mxu0
    %v162 = vadd.f32 0.0, %v161
    %v163 = vpop.f32.mrb[0].mxu0
    %164 = vmatprep.mubr.f32.mxu0 0.0
    %165 = vmatmul.mubr.f32.gmra.mrb[0].mxu0 %v48
    %v166 = vpop.f32.mrb[0].mxu0
    %v167 = vadd.f32 0.0, %v166
    %v168 = vpop.f32.mrb[0].mxu0
    %169 = vmatprep.mubr.f32.mxu0 0.0
    %170 = vmatmul.mubr.f32.gmra.mrb[0].mxu0 %v49
    %v171 = vpop.f32.mrb[0].mxu0
    %v172 = vadd.f32 0.0, %v171
    %v173 = vpop.f32.mrb[0].mxu0
    %174 = vmatprep.mubr.f32.mxu0 0.0
    %175 = vmatmul.mubr.f32.gmra.mrb[0].mxu0 %v50
    %v176 = vpop.f32.mrb[0].mxu0
    %v177 = vadd.f32 0.0, %v176
    %v178 = vpop.f32.mrb[0].mxu0
    %179 = vmatprep.mubr.f32.mxu0 0.0
    %180 = vmatmul.mubr.f32.gmra.mrb[0].mxu0 %v51
    %v181 = vpop.f32.mrb[0].mxu0
    %v182 = vadd.f32 0.0, %v181
    %v183 = vpop.f32.mrb[0].mxu0
    %184 = vmatprep.mubr.f32.mxu0 0.0
    %185 = vmatmul.mubr.f32.gmra.mrb[0].mxu0 %v52
    %v186 = vpop.f32.mrb[0].mxu0
    %v187 = vadd.f32 0.0, %v186
    %v188 = vpop.f32.mrb[0].mxu0
    %189 = vmatprep.mubr.f32.mxu0 0.0
    %190 = vmatmul.mubr.f32.gmra.mrb[0].mxu0 %v53
    %v191 = vpop.f32.mrb[0].mxu0
    %v192 = vadd.f32 0.0, %v191
    %v193 = vpop.f32.mrb[0].mxu0
    %194 = vmatprep.mubr.f32.mxu0 0.0
    %195 = vmatmul.mubr.f32.gmra.mrb[0].mxu0 %v54
    %v196 = vpop.f32.mrb[0].mxu0
    %v197 = vadd.f32 0.0, %v196
    %v198 = vpop.f32.mrb[0].mxu0
    %199 = vmatprep.mubr.f32.mxu0 0.0
    %200 = vmatmul.mubr.f32.gmra.mrb[0].mxu0 %v55
    %v201 = vpop.f32.mrb[0].mxu0
    %v202 = vadd.f32 0.0, %v201
    %v203 = vpop.f32.mrb[0].mxu0
    %204 = vmatprep.mubr.f32.mxu0 0.0
    %205 = vmatmul.mubr.f32.gmra.mrb[0].mxu0 %v56
    %v206 = vpop.f32.mrb[0].mxu0
    %v207 = vadd.f32 0.0, %v206
    %v208 = vpop.f32.mrb[0].mxu0
    %209 = vmatprep.mubr.f32.mxu0 0.0
    %210 = vmatmul.mubr.f32.gmra.mrb[0].mxu0 %v57
    %v211 = vpop.f32.mrb[0].mxu0
    %v212 = vadd.f32 0.0, %v211
    %v213 = vpop.f32.mrb[0].mxu0
    %214 = vmatprep.mubr.f32.mxu0 0.0
    %215 = vmatmul.mubr.f32.gmra.mrb[0].mxu0 %v58
    %v216 = vpop.f32.mrb[0].mxu0
    %v217 = vadd.f32 0.0, %v216
    %v218 = vpop.f32.mrb[0].mxu0
    %219 = vdwg.mxu0
    %220 = vst [vmem:[#allocation7] sm:$0xff] %v142
    %221 = vst [vmem:[#allocation7 + $0x8] sm:$0xff] %v147
    %222 = vst [vmem:[#allocation7 + $0x10] sm:$0xff] %v152
    %223 = vst [vmem:[#allocation7 + $0x18] sm:$0xff] %v157
    %224 = vst [vmem:[#allocation7 + $0x20] sm:$0xff] %v162
    %225 = vst [vmem:[#allocation7 + $0x28] sm:$0xff] %v167
    %226 = vst [vmem:[#allocation7 + $0x30] sm:$0xff] %v172
    %227 = vst [vmem:[#allocation7 + $0x38] sm:$0xff] %v177
    %228 = vst [vmem:[#allocation7 + $0x40] sm:$0xff] %v182
    %229 = vst [vmem:[#allocation7 + $0x48] sm:$0xff] %v187
    %230 = vst [vmem:[#allocation7 + $0x50] sm:$0xff] %v192
    %231 = vst [vmem:[#allocation7 + $0x58] sm:$0xff] %v197
    %232 = vst [vmem:[#allocation7 + $0x60] sm:$0xff] %v202
    %233 = vst [vmem:[#allocation7 + $0x68] sm:$0xff] %v207
    %234 = vst [vmem:[#allocation7 + $0x70] sm:$0xff] %v212
    %235 = vst [vmem:[#allocation7 + $0x78] sm:$0xff] %v217
    %v236 = vmul.f32 %v142, %v142
    %v237 = vmul.f32 %v147, %v147
    %v238 = vmul.f32 %v152, %v152
    %v239 = vmul.f32 %v157, %v157
    %v240 = vmul.f32 %v162, %v162
    %v241 = vmul.f32 %v167, %v167
    %v242 = vmul.f32 %v172, %v172
    %v243 = vmul.f32 %v177, %v177
    %v244 = vmul.f32 %v182, %v182
    %v245 = vmul.f32 %v187, %v187
    %v246 = vmul.f32 %v192, %v192
    %v247 = vmul.f32 %v197, %v197
    %v248 = vmul.f32 %v202, %v202
    %v249 = vmul.f32 %v207, %v207
    %v250 = vmul.f32 %v212, %v212
    %v251 = vmul.f32 %v217, %v217
    %252 = vmatprep.subr.mxu0 0.0
    %253 = vmatpush1.xpose.msra.mxu0 %v236
    %254 = vmatprep.subr.mxu0 0.0
    %255 = vmatpush1.xpose.msra.mxu0 %v237
    %256 = vmatprep.subr.mxu0 0.0
    %257 = vmatpush1.xpose.msra.mxu0 %v238
    %258 = vmatprep.subr.mxu0 0.0
    %259 = vmatpush1.xpose.msra.mxu0 %v239
    %260 = vmatprep.subr.mxu0 0.0
    %261 = vmatpush1.xpose.msra.mxu0 %v240
    %262 = vmatprep.subr.mxu0 0.0
    %263 = vmatpush1.xpose.msra.mxu0 %v241
    %264 = vmatprep.subr.mxu0 0.0
    %265 = vmatpush1.xpose.msra.mxu0 %v242
    %266 = vmatprep.subr.mxu0 0.0
    %267 = vmatpush1.xpose.msra.mxu0 %v243
    %268 = vmatprep.subr.mxu0 0.0
    %269 = vmatpush1.xpose.msra.mxu0 %v244
    %270 = vmatprep.subr.mxu0 0.0
    %271 = vmatpush1.xpose.msra.mxu0 %v245
    %272 = vmatprep.subr.mxu0 0.0
    %273 = vmatpush1.xpose.msra.mxu0 %v246
    %274 = vmatprep.subr.mxu0 0.0
    %275 = vmatpush1.xpose.msra.mxu0 %v247
    %276 = vmatprep.subr.mxu0 0.0
    %277 = vmatpush1.xpose.msra.mxu0 %v248
    %278 = vmatprep.subr.mxu0 0.0
    %279 = vmatpush1.xpose.msra.mxu0 %v249
    %280 = vmatprep.subr.mxu0 0.0
    %281 = vmatpush1.xpose.msra.mxu0 %v250
    %282 = vmatprep.subr.mxu0 0.0
    %283 = vmatpush1.xpose.msra.mxu0 %v251
    %284 = vmatprep.subr.mxu0 0.0
    %285 = vmatpush1.xpose.msra.mxu0 0.0
    %286 = vmatprep.subr.mxu0 0.0
    %287 = vmatpush1.xpose.msra.mxu0 0.0
    %288 = vmatprep.subr.mxu0 0.0
    %289 = vmatpush1.xpose.msra.mxu0 0.0
    %290 = vmatprep.subr.mxu0 0.0
    %291 = vmatpush1.xpose.msra.mxu0 0.0
    %292 = vmatprep.subr.mxu0 0.0
    %293 = vmatpush1.xpose.msra.mxu0 0.0
    %294 = vmatprep.subr.mxu0 0.0
    %295 = vmatpush1.xpose.msra.mxu0 0.0
    %296 = vmatprep.subr.mxu0 0.0
    %297 = vmatpush1.xpose.msra.mxu0 0.0
    %298 = vmatprep.subr.mxu0 0.0
    %299 = vmatpush1.xpose.msra.mxu0 0.0
    %300 = vmatprep.subr.mxu0 0.0
    %301 = vmatpush1.xpose.msra.mxu0 0.0
    %302 = vmatprep.subr.mxu0 0.0
    %303 = vmatpush1.xpose.msra.mxu0 0.0
    %304 = vmatprep.subr.mxu0 0.0
    %305 = vmatpush1.xpose.msra.mxu0 0.0
    %306 = vmatprep.subr.mxu0 0.0
    %307 = vmatpush1.xpose.msra.mxu0 0.0
    %308 = vmatprep.subr.mxu0 0.0
    %309 = vmatpush1.xpose.msra.mxu0 0.0
    %310 = vmatprep.subr.mxu0 0.0
    %311 = vmatpush1.xpose.msra.mxu0 0.0
    %312 = vmatprep.subr.mxu0 0.0
    %313 = vmatpush1.xpose.msra.mxu0 0.0
    %314 = vmatprep.subr.mxu0 0.0
    %315 = vmatpush1.xpose.msra.mxu0 0.0
    %316 = vmatprep.mubr.f32.mxu0 0.0
    %317 = vmatmul.mubr.f32.gmra.mrb[0].mxu0 1.0
    %v318 = vpop.f32.mrb[0].mxu0
    %v319 = vadd.f32 0.0, %v318
    %v320 = vpop.f32.mrb[0].mxu0
    %321 = vdwg.mxu0
    %322 = vst [vmem:[#allocation8] sm:$0x1] %v319
    // Predicated region
    $region18: #{tpu_custom_call.1} parent=1 // pred_check
      _
    $region19: #{tpu_custom_call.1} parent=1 // pred_check_branch
      %324 = sbr.rel (0) target = $region21
    $region20: #{tpu_custom_call.1} parent=1 // pred_region
      %s326 = ssub.s32 2048, 2048
      %327 = vsyncadd [#allocation4], %s326
      %s328 = sshll.u32 [#allocation7], 4
      %s329 = int_to_ptr.vmem [resolvable:$true] %s328
      %334 = dma.vmem_to_hbm [thread:$0]  %s329, 2048, %s2, [#allocation4], 128, 128, 8
    $region21: #{tpu_custom_call.1} parent=1 // pred_fallthru
      _
    // Predicated region
    $region22: #{tpu_custom_call.1} parent=1 // pred_check
      _
    $region23: #{tpu_custom_call.1} parent=1 // pred_check_branch
      %336 = sbr.rel (0) target = $region25
    $region24: #{tpu_custom_call.1} parent=1 // pred_region
      %s338 = ssub.s32 16, 16
      %339 = vsyncadd [#allocation9], %s338
      %s341 = sshll.u32 [#allocation8], 4
      %s342 = int_to_ptr.vmem [resolvable:$true] %s341
      %344 = dma.vmem_to_hbm [thread:$0]  %s342, 16, %s3, [#allocation9]
    $region25: #{tpu_custom_call.1} parent=1 // pred_fallthru
      _
    // Predicated region
    $region26: #{tpu_custom_call.1} parent=1 // pred_check
      _
    $region27: #{tpu_custom_call.1} parent=1 // pred_check_branch
      %346 = sbr.rel (0) target = $region29
    $region28: #{tpu_custom_call.1} parent=1 // pred_region
      %347 = dma.done [#allocation4], 2048
    $region29: #{tpu_custom_call.1} parent=1 // pred_fallthru
      _
    // Predicated region
    $region30: #{tpu_custom_call.1} parent=1 // pred_check
      _
    $region31: #{tpu_custom_call.1} parent=1 // pred_check_branch
      %349 = sbr.rel (0) target = $region33
    $region32: #{tpu_custom_call.1} parent=1 // pred_region
      %350 = dma.done [#allocation9], 16
    $region33: #{tpu_custom_call.1} parent=1 // pred_fallthru
      _
    %351 = vsyncpa [#allocation3], 1
    %352 = vsyncpa [#allocation6], 1
    %353 = vsyncpa [#allocation4], 1
    %354 = vsyncpa [#allocation9], 1

</llo_original>
